<compile_context>
chip_gen: v5e
topology: v5e:2x2
jax: 0.10.0
libtpu: 0.0.40
codegen_flags: <defaults>
</compile_context>

<pallas_src>
import jax
import jax.numpy as jnp
from jax.experimental import pallas as pl
from jax.experimental.pallas import tpu as pltpu


def _fusion_kernel(ntw_ref, nfw_ref, time_ref, freq_ref, out_ref):
    # ntw_ref/nfw_ref: (1, col_tile) f32 pre-normalized, pre-broadcast weights.
    # time_ref/freq_ref/out_ref: (row_tile, col_tile) lane-dense feature tiles.
    t = time_ref[...].astype(jnp.float32)
    f = freq_ref[...].astype(jnp.float32)
    out_ref[...] = (t * ntw_ref[...] + f * nfw_ref[...]).astype(out_ref.dtype)


def _choose_tiles(B, SD, itemsize):
    """Pick (row_tile, col_tile, vmem_limit_bytes) for the flattened (B, SD) view."""
    # Sublane pack per dtype width: f32 -> 8, bf16/fp16 -> 16, int8/fp8 -> 32.
    pack = {4: 8, 2: 16, 1: 32}.get(itemsize, 8)

    # Generation-aware VMEM budgeting.
    try:
        vmem_cap = pltpu.get_tpu_info().vmem_capacity_bytes
    except Exception:
        vmem_cap = 128 * 1024 * 1024
    if vmem_cap <= 64 * 1024 * 1024:
        # v7x-class: 64 MiB per TensorCore -> smaller tiles, <=48 MiB budget.
        target_tile_bytes = 4 * 1024 * 1024
        vmem_limit = 48 * 1024 * 1024
    else:
        # v5e/v6e: 128 MiB physical -> bigger tiles amortize per-step overhead.
        target_tile_bytes = 8 * 1024 * 1024
        vmem_limit = 64 * 1024 * 1024

    # Column tile over the flattened SD axis: multiple of 128, capped so the
    # weight blocks stay tiny and the feature tile stays bounded for huge SD.
    if SD % 128 == 0:
        col_tile = min(SD, 2048)
    else:
        col_tile = SD  # full-dim block (allowed exception to the /128 rule)

    # Row tile: as many pack-multiples of rows as fit the per-tile byte budget.
    if B <= pack:
        row_tile = B  # full-dim block (allowed exception to the /pack rule)
    else:
        rows = max(pack, target_tile_bytes // max(1, col_tile * itemsize))
        row_tile = min(B, max(pack, (rows // pack) * pack))

    # v7x megacore: if the grid collapsed to a single step, split the column
    # axis so the "parallel" axes have >=2 steps and both TensorCores get work.
    row_steps = -(-B // row_tile)
    col_steps = -(-SD // col_tile)
    if row_steps * col_steps == 1 and SD % 128 == 0 and SD >= 256:
        col_tile = max(128, ((SD // 2) // 128) * 128)

    return row_tile, col_tile, vmem_limit


def dynamic_mix_attention_fusion(time_weights, freq_weights,
                                 time_features, freq_features):
    """time_weights/freq_weights: (S,); features: (B, S, D) -> fused (B, S, D)."""
    B, S, D = time_features.shape
    feat_dtype = time_features.dtype
    SD = S * D

    # --- weight normalization in f32 (matches PyTorch param dtype) ----------
    tw = time_weights.astype(jnp.float32)
    fw = freq_weights.astype(jnp.float32)
    total = tw + fw
    total = total + (total == 0.0).astype(jnp.float32) * 1e-08
    ntw = tw / total                                   # (S,)
    nfw = fw / total                                   # (S,)
    # Pre-broadcast over the feature dim, flatten lane-dense, KEEP f32.
    ntw = jnp.broadcast_to(ntw[:, None], (S, D)).reshape(1, SD)
    nfw = jnp.broadcast_to(nfw[:, None], (S, D)).reshape(1, SD)

    # --- lane-dense flattened feature view ----------------------------------
    t2 = time_features.reshape(B, SD)
    f2 = freq_features.reshape(B, SD)

    # --- 2-D tiling ----------------------------------------------------------
    itemsize = jnp.dtype(feat_dtype).itemsize
    row_tile, col_tile, vmem_limit = _choose_tiles(B, SD, itemsize)
    grid = (pl.cdiv(B, row_tile), pl.cdiv(SD, col_tile))

    out2 = pl.pallas_call(
        _fusion_kernel,
        out_shape=jax.ShapeDtypeStruct((B, SD), feat_dtype),
        grid_spec=pltpu.PrefetchScalarGridSpec(
            num_scalar_prefetch=0,
            grid=grid,
            in_specs=[
                pl.BlockSpec((1, col_tile), lambda r, c: (0, c)),          # norm time w (f32)
                pl.BlockSpec((1, col_tile), lambda r, c: (0, c)),          # norm freq w (f32)
                pl.BlockSpec((row_tile, col_tile), lambda r, c: (r, c)),   # time feats
                pl.BlockSpec((row_tile, col_tile), lambda r, c: (r, c)),   # freq feats
            ],
            out_specs=pl.BlockSpec((row_tile, col_tile), lambda r, c: (r, c)),
        ),
        compiler_params=pltpu.CompilerParams(
            dimension_semantics=("parallel", "parallel"),
            vmem_limit_bytes=vmem_limit,
        ),
    )(ntw, nfw, t2, f2)

    return out2.reshape(B, S, D)


if __name__ == "__main__":
    key = jax.random.PRNGKey(0)
    B, S, D = 2, 8, 32   # batch, seq_len, feature dim

    k1, k2, k3, k4 = jax.random.split(key, 4)
    # Parameters: torch.rand(seq_len) -> uniform [0, 1), deterministic here.
    time_weights = jax.random.uniform(k1, (S,), dtype=jnp.float32)
    freq_weights = jax.random.uniform(k2, (S,), dtype=jnp.float32)
    time_features = jax.random.normal(k3, (B, S, D), dtype=jnp.float32)
    freq_features = jax.random.normal(k4, (B, S, D), dtype=jnp.float32)

    out = dynamic_mix_attention_fusion(time_weights, freq_weights,
                                       time_features, freq_features)
    out = jax.block_until_ready(out)

    # Pure-JAX reference (mirrors the PyTorch forward exactly).
    total = time_weights + freq_weights
    total = total + (total == 0.0).astype(jnp.float32) * 1e-08
    ntw = (time_weights / total)[:, None]
    nfw = (freq_weights / total)[:, None]
    ref = time_features * ntw + freq_features * nfw
    assert jnp.allclose(out, ref, atol=1e-6, rtol=1e-6)

    print("KERNEL_OK")
</pallas_src>

<mosaic_0001>
module attributes {stable_mosaic.version = 11 : i64} {
  func.func @_fusion_kernel(%arg0: i32, %arg1: i32, %arg2: memref<1x128xf32, #tpu.memory_space<vmem>>, %arg3: memref<1x128xf32, #tpu.memory_space<vmem>>, %arg4: memref<2x128xf32, #tpu.memory_space<vmem>>, %arg5: memref<2x128xf32, #tpu.memory_space<vmem>>, %arg6: memref<2x128xf32, #tpu.memory_space<vmem>>) attributes {dimension_semantics = [#tpu.dimension_semantics<parallel>, #tpu.dimension_semantics<parallel>], iteration_bounds = array<i64: 1, 2>, scalar_prefetch = 0 : i64, scratch_operands = 0 : i64, tpu.core_type = #tpu.core_type<tc>, window_params = [{transform_indices = @transform_0, window_bounds = array<i64: 1, 128>}, {transform_indices = @transform_1, window_bounds = array<i64: 1, 128>}, {transform_indices = @transform_2, window_bounds = array<i64: 2, 128>}, {transform_indices = @transform_3, window_bounds = array<i64: 2, 128>}, {transform_indices = @transform_4, window_bounds = array<i64: 2, 128>}]} {
    %c0 = arith.constant 0 : index
    %c0_0 = arith.constant 0 : index
    %0 = vector.load %arg4[%c0, %c0_0] : memref<2x128xf32, #tpu.memory_space<vmem>>, vector<2x128xf32>
    %c0_1 = arith.constant 0 : index
    %c0_2 = arith.constant 0 : index
    %1 = vector.load %arg5[%c0_1, %c0_2] : memref<2x128xf32, #tpu.memory_space<vmem>>, vector<2x128xf32>
    %c0_3 = arith.constant 0 : index
    %c0_4 = arith.constant 0 : index
    %2 = vector.load %arg2[%c0_3, %c0_4] : memref<1x128xf32, #tpu.memory_space<vmem>>, vector<1x128xf32>
    %3 = vector.broadcast %2 : vector<1x128xf32> to vector<2x128xf32>
    %4 = arith.mulf %0, %3 : vector<2x128xf32>
    %c0_5 = arith.constant 0 : index
    %c0_6 = arith.constant 0 : index
    %5 = vector.load %arg3[%c0_5, %c0_6] : memref<1x128xf32, #tpu.memory_space<vmem>>, vector<1x128xf32>
    %6 = vector.broadcast %5 : vector<1x128xf32> to vector<2x128xf32>
    %7 = arith.mulf %1, %6 : vector<2x128xf32>
    %8 = arith.addf %4, %7 : vector<2x128xf32>
    %c0_7 = arith.constant 0 : index
    %c0_8 = arith.constant 0 : index
    %9 = vector.load %arg6[%c0_7, %c0_8] : memref<2x128xf32, #tpu.memory_space<vmem>>, vector<2x128xf32>
    tpu.vector_store %arg6[%c0_7, %c0_8], %8 {strides = array<i32>} : memref<2x128xf32, #tpu.memory_space<vmem>>, vector<2x128xf32>,
    return
  }
  func.func @transform_0(%arg0: i32, %arg1: i32) -> (i32, i32) {
    %c0_i32 = arith.constant 0 : i32
    %c0_i32_0 = arith.constant 0 : i32
    return %c0_i32, %arg1 : i32, i32
  }
  func.func @transform_1(%arg0: i32, %arg1: i32) -> (i32, i32) {
    %c0_i32 = arith.constant 0 : i32
    %c0_i32_0 = arith.constant 0 : i32
    return %c0_i32, %arg1 : i32, i32
  }
  func.func @transform_2(%arg0: i32, %arg1: i32) -> (i32, i32) {
    %c0_i32 = arith.constant 0 : i32
    return %arg0, %arg1 : i32, i32
  }
  func.func @transform_3(%arg0: i32, %arg1: i32) -> (i32, i32) {
    %c0_i32 = arith.constant 0 : i32
    return %arg0, %arg1 : i32, i32
  }
  func.func @transform_4(%arg0: i32, %arg1: i32) -> (i32, i32) {
    %c0_i32 = arith.constant 0 : i32
    return %arg0, %arg1 : i32, i32
  }
}

</mosaic_0001>

<llo_original>
// kernel: tpu_custom_call.1
$region0: #{tpu_custom_call.1}
  #allocation0 [shape = 'u32[]', space=smem, size = 0x4, offset = 0x4, fixed_abs, tag = 'smem constant byte address 0x4 - core index']
  #allocation1 [shape = 'u32[72,128]{1,0:T(1,128)}', space=vmem, size = 0x9000, scoped, tag = 'internal scratch']
  %s0 = inlined_call_operand.hbm [shape: f32[1,256], index: 0, kind: input, shape index: {}]
  %s1 = inlined_call_operand.hbm [shape: f32[1,256], index: 1, kind: input, shape index: {}]
  %s2 = inlined_call_operand.hbm [shape: f32[2,256], index: 2, kind: input, shape index: {}]
  %s3 = inlined_call_operand.hbm [shape: f32[2,256], index: 3, kind: input, shape index: {}]
  %s4 = inlined_call_operand.hbm [shape: f32[2,256], index: 4, kind: output, shape index: {}]
  %s5 = sld [smem:[#allocation0]]
  $region65: #{tpu_custom_call.1} parent=0
    _
  %s7 = ssub.s32 1, %s5
  %s8 = scalar_select 0, %s7, %s5
  $region1: #{tpu_custom_call.1} parent=0
    #allocation2 [shape = 'u8[1024]{0}', space=vmem, size = 0x400, scoped, tag = 'input window, operand 0']
    #allocation3 [shape = 's32[2]{0}', space=sflag, size = 0x8, scoped, tag = 'scoped memory for tpu_custom_call.1']
    #allocation4 [shape = 's32[2]{0}', space=sflag, size = 0x8, scoped, tag = 'scoped memory for tpu_custom_call.1']
    #allocation5 [shape = 'u8[1024]{0}', space=vmem, size = 0x400, scoped, tag = 'input window, operand 1']
    #allocation6 [shape = 's32[2]{0}', space=sflag, size = 0x8, scoped, tag = 'scoped memory for tpu_custom_call.1']
    #allocation7 [shape = 'u8[2048]{0}', space=vmem, size = 0x800, scoped, tag = 'input window, operand 2']
    #allocation8 [shape = 'u8[2048]{0}', space=vmem, size = 0x800, scoped, tag = 'input window, operand 3']
    #allocation9 [shape = 's32[2]{0}', space=sflag, size = 0x8, scoped, tag = 'scoped memory for tpu_custom_call.1']
    #allocation10 [shape = 'u8[2048]{0}', space=vmem, size = 0x800, scoped, tag = 'output window, operand 0']
    %9 = vsyncpa [#allocation3], 0
    %s10 = scalar_lea.sflag [#allocation3], 1
    %11 = vsyncpa %s10, 0
    %12 = vsyncpa [#allocation6], 0
    %s13 = scalar_lea.sflag [#allocation6], 1
    %14 = vsyncpa %s13, 0
    %15 = vsyncpa [#allocation9], 0
    %s16 = scalar_lea.sflag [#allocation9], 1
    %17 = vsyncpa %s16, 0
    %18 = vsyncpa [#allocation4], 0
    %s19 = scalar_lea.sflag [#allocation4], 1
    %20 = vsyncpa %s19, 0
    loop: start=0, step=1, limit=4
    $region2: #{tpu_custom_call.1} parent=1 // loop_pre_header
      _
    $region3: #{tpu_custom_call.1} parent=1 // loop_header
      %s22 = sphi 0, %s26
      %p23 = scmp.ge.s32.totalorder %s22, 4
      %s29 = sphi 0, %s41
      %s30 = sphi 0, %s37
      %s31 = sphi 0, %s29
      %s32 = sphi 0, %s30
      %s33 = sphi 0, %s31
      %s34 = sphi 0, %s32
      %s44 = sphi 0, %s46
      %s47 = sphi 0, %s44
      %s48 = sphi 0, %s47
      %s64 = sphi 0, %s48
      %s70 = sphi 0, %s72
      %s73 = sphi 0, %s70
      %s74 = sphi 0, %s73
      %s90 = sphi 0, %s74
      %s98 = sphi 0, %s100
      %s101 = sphi 0, %s98
      %s102 = sphi 0, %s101
      %s118 = sphi 0, %s102
      %s126 = sphi 0, %s128
      %s129 = sphi 0, %s126
      %s130 = sphi 0, %s129
      %s146 = sphi 0, %s130
      %s154 = sphi 0, %s156
      %s157 = sphi 0, %s154
      %s158 = sphi 0, %s157
      %s174 = sphi 0, %s158
    $region4: #{tpu_custom_call.1} parent=1 // loop_header_branch
      %25 = sbr.rel (%p23) target = $region8
    $region5: #{tpu_custom_call.1} parent=1 // loop_body
      %s27 = ssub.s32 %s22, 1
      %s28 = ssub.s32 %s22, 2
      %s35 = sadd.s32 1, %s30
      %p36 = scmp.ge.s32.totalorder %s35, 2
      %s37 = scalar_select %p36, 0, %s35
      %s38 = sadd.s32 1, %s29
      %s39 = scalar_select %p36, %s38, %s29
      %p40 = scmp.ge.s32.totalorder %s39, 1
      %s41 = scalar_select %p40, 0, %s39
      %s42 = ssub.s32 %s30, %s37
      %p43 = scmp.eq.s32.totalorder %s42, 0
      %s45 = sadd.s32 %s44, 1
      %s46 = scalar_select %p43, %s44, %s45
      %p49 = pneg %p43
      %p50 = scmp.eq.s32.totalorder %s22, 1
      %p51 = por %p49, %p50
      %p52 = scmp.ne.s32.totalorder %s44, %s47
      %p53 = scmp.eq.s32.totalorder %s22, 0
      %p54 = por %p52, %p53
      %p55 = scmp.ne.s32.totalorder %s44, %s47
      %p56 = scmp.eq.s32.totalorder %s27, 1
      %p57 = por %p55, %p56
      %p58 = scmp.ne.s32.totalorder %s47, %s48
      %p59 = scmp.eq.s32.totalorder %s27, 0
      %p60 = por %p58, %p59
      %p61 = scmp.ne.s32.totalorder %s47, %s48
      %p62 = scmp.eq.s32.totalorder %s28, 1
      %p63 = por %p61, %p62
      %p65 = scmp.ne.s32.totalorder %s48, %s64
      %p66 = scmp.eq.s32.totalorder %s28, 0
      %p67 = por %p65, %p66
      %s68 = ssub.s32 %s30, %s37
      %p69 = scmp.eq.s32.totalorder %s68, 0
      %s71 = sadd.s32 %s70, 1
      %s72 = scalar_select %p69, %s70, %s71
      %p75 = pneg %p69
      %p76 = scmp.eq.s32.totalorder %s22, 1
      %p77 = por %p75, %p76
      %p78 = scmp.ne.s32.totalorder %s70, %s73
      %p79 = scmp.eq.s32.totalorder %s22, 0
      %p80 = por %p78, %p79
      %p81 = scmp.ne.s32.totalorder %s70, %s73
      %p82 = scmp.eq.s32.totalorder %s27, 1
      %p83 = por %p81, %p82
      %p84 = scmp.ne.s32.totalorder %s73, %s74
      %p85 = scmp.eq.s32.totalorder %s27, 0
      %p86 = por %p84, %p85
      %p87 = scmp.ne.s32.totalorder %s73, %s74
      %p88 = scmp.eq.s32.totalorder %s28, 1
      %p89 = por %p87, %p88
      %p91 = scmp.ne.s32.totalorder %s74, %s90
      %p92 = scmp.eq.s32.totalorder %s28, 0
      %p93 = por %p91, %p92
      %s94 = ssub.s32 %s29, %s41
      %s95 = ssub.s32 %s30, %s37
      %s96 = sor.u32 %s94, %s95
      %p97 = scmp.eq.s32.totalorder %s96, 0
      %s99 = sadd.s32 %s98, 1
      %s100 = scalar_select %p97, %s98, %s99
      %p103 = pneg %p97
      %p104 = scmp.eq.s32.totalorder %s22, 1
      %p105 = por %p103, %p104
      %p106 = scmp.ne.s32.totalorder %s98, %s101
      %p107 = scmp.eq.s32.totalorder %s22, 0
      %p108 = por %p106, %p107
      %p109 = scmp.ne.s32.totalorder %s98, %s101
      %p110 = scmp.eq.s32.totalorder %s27, 1
      %p111 = por %p109, %p110
      %p112 = scmp.ne.s32.totalorder %s101, %s102
      %p113 = scmp.eq.s32.totalorder %s27, 0
      %p114 = por %p112, %p113
      %p115 = scmp.ne.s32.totalorder %s101, %s102
      %p116 = scmp.eq.s32.totalorder %s28, 1
      %p117 = por %p115, %p116
      %p119 = scmp.ne.s32.totalorder %s102, %s118
      %p120 = scmp.eq.s32.totalorder %s28, 0
      %p121 = por %p119, %p120
      %s122 = ssub.s32 %s29, %s41
      %s123 = ssub.s32 %s30, %s37
      %s124 = sor.u32 %s122, %s123
      %p125 = scmp.eq.s32.totalorder %s124, 0
      %s127 = sadd.s32 %s126, 1
      %s128 = scalar_select %p125, %s126, %s127
      %p131 = pneg %p125
      %p132 = scmp.eq.s32.totalorder %s22, 1
      %p133 = por %p131, %p132
      %p134 = scmp.ne.s32.totalorder %s126, %s129
      %p135 = scmp.eq.s32.totalorder %s22, 0
      %p136 = por %p134, %p135
      %p137 = scmp.ne.s32.totalorder %s126, %s129
      %p138 = scmp.eq.s32.totalorder %s27, 1
      %p139 = por %p137, %p138
      %p140 = scmp.ne.s32.totalorder %s129, %s130
      %p141 = scmp.eq.s32.totalorder %s27, 0
      %p142 = por %p140, %p141
      %p143 = scmp.ne.s32.totalorder %s129, %s130
      %p144 = scmp.eq.s32.totalorder %s28, 1
      %p145 = por %p143, %p144
      %p147 = scmp.ne.s32.totalorder %s130, %s146
      %p148 = scmp.eq.s32.totalorder %s28, 0
      %p149 = por %p147, %p148
      %s150 = ssub.s32 %s29, %s41
      %s151 = ssub.s32 %s30, %s37
      %s152 = sor.u32 %s150, %s151
      %p153 = scmp.eq.s32.totalorder %s152, 0
      %s155 = sadd.s32 %s154, 1
      %s156 = scalar_select %p153, %s154, %s155
      %p159 = pneg %p153
      %p160 = scmp.eq.s32.totalorder %s22, 1
      %p161 = por %p159, %p160
      %p162 = scmp.ne.s32.totalorder %s154, %s157
      %p163 = scmp.eq.s32.totalorder %s22, 0
      %p164 = por %p162, %p163
      %p165 = scmp.ne.s32.totalorder %s154, %s157
      %p166 = scmp.eq.s32.totalorder %s27, 1
      %p167 = por %p165, %p166
      %p168 = scmp.ne.s32.totalorder %s157, %s158
      %p169 = scmp.eq.s32.totalorder %s27, 0
      %p170 = por %p168, %p169
      %p171 = scmp.ne.s32.totalorder %s157, %s158
      %p172 = scmp.eq.s32.totalorder %s28, 1
      %p173 = por %p171, %p172
      %p175 = scmp.ne.s32.totalorder %s158, %s174
      %p176 = scmp.eq.s32.totalorder %s28, 0
      %p177 = por %p175, %p176
      %p178 = scmp.le.s32.totalorder 1, %s22
      %p179 = scmp.lt.s32.totalorder %s22, 3
      %p180 = pnand %p178, %p179
      %p181 = pneg %p180
      // Predicated region
      $region9: #{tpu_custom_call.1} parent=5 // pred_check
        _
      $region10: #{tpu_custom_call.1} parent=5 // pred_check_branch
        %183 = sbr.rel (%p180) target = $region12
      $region11: #{tpu_custom_call.1} parent=5 // pred_region
        %s184 = ssub.s32 %s22, 1
      $region12: #{tpu_custom_call.1} parent=5 // pred_fallthru
        _
      %p185 = scmp.lt.s32.totalorder %s22, 2
      // Predicated region
      $region13: #{tpu_custom_call.1} parent=5 // pred_check
        %p186 = pneg %p185
      $region14: #{tpu_custom_call.1} parent=5 // pred_check_branch
        %188 = sbr.rel (%p186) target = $region16
      $region15: #{tpu_custom_call.1} parent=5 // pred_region
        // Predicated region
        $region17: #{tpu_custom_call.1} parent=15 // pred_check
          %p189 = pneg %p54
        $region18: #{tpu_custom_call.1} parent=15 // pred_check_branch
          %191 = sbr.rel (%p189) target = $region20
        $region19: #{tpu_custom_call.1} parent=15 // pred_region
          %s192 = sand.u32 %s44, 1
          %s193 = scalar_lea.sflag [#allocation3], %s192
          %s194 = sand.u32 %s44, 1
          %s195 = scalar_lea.vmem [#allocation2], %s194
          %197 = vsyncadd %s193, 0
          %s198 = scalar_lea.hbm %s0, %s30
          %s200 = sshll.u32 %s198, 4
          %s201 = int_to_ptr.hbm [resolvable:$true] %s200
          %s202 = sshll.u32 %s195, 4
          %s203 = int_to_ptr.vmem [resolvable:$true] %s202
          %205 = dma.hbm_to_vmem [thread:$0]  %s201, 16, %s203, %s193
        $region20: #{tpu_custom_call.1} parent=15 // pred_fallthru
          _
        // Predicated region
        $region21: #{tpu_custom_call.1} parent=15 // pred_check
          %p206 = pneg %p80
        $region22: #{tpu_custom_call.1} parent=15 // pred_check_branch
          %208 = sbr.rel (%p206) target = $region24
        $region23: #{tpu_custom_call.1} parent=15 // pred_region
          %s209 = sand.u32 %s22, 1
          %s210 = scalar_lea.sflag [#allocation6], %s209
          %s211 = sand.u32 %s70, 1
          %s212 = scalar_lea.vmem [#allocation5], %s211
          %214 = vsyncadd %s210, 0
          %s215 = scalar_lea.hbm %s1, %s30
          %s217 = sshll.u32 %s215, 4
          %s218 = int_to_ptr.hbm [resolvable:$true] %s217
          %s219 = sshll.u32 %s212, 4
          %s220 = int_to_ptr.vmem [resolvable:$true] %s219
          %222 = dma.hbm_to_vmem [thread:$0]  %s218, 16, %s220, %s210
        $region24: #{tpu_custom_call.1} parent=15 // pred_fallthru
          _
        // Predicated region
        $region25: #{tpu_custom_call.1} parent=15 // pred_check
          %p223 = pneg %p108
        $region26: #{tpu_custom_call.1} parent=15 // pred_check_branch
          %225 = sbr.rel (%p223) target = $region28
        $region27: #{tpu_custom_call.1} parent=15 // pred_region
          %s226 = sand.u32 %s22, 1
          %s227 = scalar_lea.sflag [#allocation6], %s226
          %s228 = sand.u32 %s98, 1
          %s229 = smul.addr %s228, 2
          %s230 = scalar_lea.vmem [#allocation7], %s229
          %232 = vsyncadd %s227, 0
          %s233 = smul.addr %s29, 2
          %s234 = sadd.s32 %s30, %s233
          %s235 = smul.addr %s234, 2
          %s236 = scalar_lea.hbm %s2, %s235
          %s238 = sshll.u32 %s236, 4
          %s239 = int_to_ptr.hbm [resolvable:$true] %s238
          %s240 = sshll.u32 %s230, 4
          %s241 = int_to_ptr.vmem [resolvable:$true] %s240
          %243 = dma.hbm_to_vmem [thread:$0]  %s239, 32, %s241, %s227
        $region28: #{tpu_custom_call.1} parent=15 // pred_fallthru
          _
        // Predicated region
        $region29: #{tpu_custom_call.1} parent=15 // pred_check
          %p244 = pneg %p136
        $region30: #{tpu_custom_call.1} parent=15 // pred_check_branch
          %246 = sbr.rel (%p244) target = $region32
        $region31: #{tpu_custom_call.1} parent=15 // pred_region
          %s247 = sand.u32 %s126, 1
          %s248 = scalar_lea.sflag [#allocation9], %s247
          %s249 = sand.u32 %s126, 1
          %s250 = smul.addr %s249, 2
          %s251 = scalar_lea.vmem [#allocation8], %s250
          %253 = vsyncadd %s248, 0
          %s254 = smul.addr %s29, 2
          %s255 = sadd.s32 %s30, %s254
          %s256 = smul.addr %s255, 2
          %s257 = scalar_lea.hbm %s3, %s256
          %s259 = sshll.u32 %s257, 4
          %s260 = int_to_ptr.hbm [resolvable:$true] %s259
          %s261 = sshll.u32 %s251, 4
          %s262 = int_to_ptr.vmem [resolvable:$true] %s261
          %264 = dma.hbm_to_vmem [thread:$0]  %s260, 32, %s262, %s248
        $region32: #{tpu_custom_call.1} parent=15 // pred_fallthru
          _
      $region16: #{tpu_custom_call.1} parent=5 // pred_fallthru
        _
      %p265 = scmp.le.s32.totalorder 1, %s22
      %p266 = scmp.lt.s32.totalorder %s22, 3
      %p267 = pnand %p265, %p266
      %p268 = pneg %p267
      // Predicated region
      $region33: #{tpu_custom_call.1} parent=5 // pred_check
        _
      $region34: #{tpu_custom_call.1} parent=5 // pred_check_branch
        %270 = sbr.rel (%p267) target = $region36
      $region35: #{tpu_custom_call.1} parent=5 // pred_region
        %s271 = ssub.s32 %s22, 1
        %s272 = sand.u32 %s47, 1
        %s273 = scalar_lea.sflag [#allocation3], %s272
        %s274 = sand.u32 %s47, 1
        %s275 = scalar_lea.vmem [#allocation2], %s274
        // Predicated region
        $region37: #{tpu_custom_call.1} parent=35 // pred_check
          %p276 = pneg %p60
        $region38: #{tpu_custom_call.1} parent=35 // pred_check_branch
          %278 = sbr.rel (%p276) target = $region40
        $region39: #{tpu_custom_call.1} parent=35 // pred_region
          %280 = dma.done %s273, 16
        $region40: #{tpu_custom_call.1} parent=35 // pred_fallthru
          _
        %s281 = sand.u32 %s27, 1
        %s282 = scalar_lea.sflag [#allocation6], %s281
        %s283 = sand.u32 %s73, 1
        %s284 = scalar_lea.vmem [#allocation5], %s283
        // Predicated region
        $region41: #{tpu_custom_call.1} parent=35 // pred_check
          %p285 = pneg %p86
        $region42: #{tpu_custom_call.1} parent=35 // pred_check_branch
          %287 = sbr.rel (%p285) target = $region44
        $region43: #{tpu_custom_call.1} parent=35 // pred_region
          %289 = dma.done %s282, 16
        $region44: #{tpu_custom_call.1} parent=35 // pred_fallthru
          _
        %s290 = sand.u32 %s27, 1
        %s291 = scalar_lea.sflag [#allocation6], %s290
        %s292 = sand.u32 %s101, 1
        %s293 = smul.addr %s292, 2
        %s294 = scalar_lea.vmem [#allocation7], %s293
        // Predicated region
        $region45: #{tpu_custom_call.1} parent=35 // pred_check
          %p295 = pneg %p114
        $region46: #{tpu_custom_call.1} parent=35 // pred_check_branch
          %297 = sbr.rel (%p295) target = $region48
        $region47: #{tpu_custom_call.1} parent=35 // pred_region
          %299 = dma.done %s291, 32
        $region48: #{tpu_custom_call.1} parent=35 // pred_fallthru
          _
        %s300 = sand.u32 %s129, 1
        %s301 = scalar_lea.sflag [#allocation9], %s300
        %s302 = sand.u32 %s129, 1
        %s303 = smul.addr %s302, 2
        %s304 = scalar_lea.vmem [#allocation8], %s303
        // Predicated region
        $region49: #{tpu_custom_call.1} parent=35 // pred_check
          %p305 = pneg %p142
        $region50: #{tpu_custom_call.1} parent=35 // pred_check_branch
          %307 = sbr.rel (%p305) target = $region52
        $region51: #{tpu_custom_call.1} parent=35 // pred_region
          %309 = dma.done %s301, 32
        $region52: #{tpu_custom_call.1} parent=35 // pred_fallthru
          _
        %s310 = sand.u32 %s47, 1
        %s311 = scalar_lea.sflag [#allocation3], %s310
        %s312 = sand.u32 %s47, 1
        %s313 = scalar_lea.vmem [#allocation2], %s312
        %p314 = pneg %p60
        %p315 = pneg %p57
        %s316 = sand.u32 %s27, 1
        %s317 = scalar_lea.sflag [#allocation6], %s316
        %s318 = sand.u32 %s73, 1
        %s319 = scalar_lea.vmem [#allocation5], %s318
        %p320 = pneg %p86
        %p321 = pneg %p83
        %s322 = sand.u32 %s27, 1
        %s323 = scalar_lea.sflag [#allocation6], %s322
        %s324 = sand.u32 %s101, 1
        %s325 = smul.addr %s324, 2
        %s326 = scalar_lea.vmem [#allocation7], %s325
        %p327 = pneg %p114
        %p328 = pneg %p111
        %s329 = sand.u32 %s129, 1
        %s330 = scalar_lea.sflag [#allocation9], %s329
        %s331 = sand.u32 %s129, 1
        %s332 = smul.addr %s331, 2
        %s333 = scalar_lea.vmem [#allocation8], %s332
        %p334 = pneg %p142
        %p335 = pneg %p139
        %p336 = pneg %p170
        %p337 = pneg %p167
        %s338 = sand.u32 %s157, 1
        %s339 = scalar_lea.sflag [#allocation4], %s338
        %s340 = sand.u32 %s157, 1
        %s341 = smul.addr %s340, 2
        %s342 = scalar_lea.vmem [#allocation10], %s341
        %v343 = vld [vmem:[%s294] sm:$0x3]
        %v344 = vld [vmem:[%s304] sm:$0x3]
        %v345 = vld [vmem:[%s275] sm:$0x1]
        %v347 = vperm.slane %v345, 0
        %v349 = vmul.f32 %v343, %v347
        %v350 = vld [vmem:[%s284] sm:$0x1]
        %v352 = vperm.slane %v350, 0
        %v354 = vmul.f32 %v344, %v352
        %v355 = vadd.f32 %v349, %v354
        %356 = vst [vmem:[%s342] sm:$0x3] %v355
        %s357 = sand.u32 %s157, 1
        %s358 = scalar_lea.sflag [#allocation4], %s357
        %s359 = sand.u32 %s157, 1
        %s360 = smul.addr %s359, 2
        %s361 = scalar_lea.vmem [#allocation10], %s360
        // Predicated region
        $region53: #{tpu_custom_call.1} parent=35 // pred_check
          %p362 = pneg %p167
        $region54: #{tpu_custom_call.1} parent=35 // pred_check_branch
          %364 = sbr.rel (%p362) target = $region56
        $region55: #{tpu_custom_call.1} parent=35 // pred_region
          %366 = vsyncadd %s358, 0
          %s367 = smul.addr %s31, 2
          %s368 = sadd.s32 %s32, %s367
          %s369 = smul.addr %s368, 2
          %s370 = scalar_lea.hbm %s4, %s369
          %s372 = sshll.u32 %s361, 4
          %s373 = int_to_ptr.vmem [resolvable:$true] %s372
          %s374 = sshll.u32 %s370, 4
          %s375 = int_to_ptr.hbm [resolvable:$true] %s374
          %377 = dma.vmem_to_hbm [thread:$0]  %s373, 32, %s375, %s358
        $region56: #{tpu_custom_call.1} parent=35 // pred_fallthru
          _
      $region36: #{tpu_custom_call.1} parent=5 // pred_fallthru
        _
      %p378 = scmp.le.s32.totalorder 2, %s22
      // Predicated region
      $region57: #{tpu_custom_call.1} parent=5 // pred_check
        %p379 = pneg %p378
      $region58: #{tpu_custom_call.1} parent=5 // pred_check_branch
        %381 = sbr.rel (%p379) target = $region60
      $region59: #{tpu_custom_call.1} parent=5 // pred_region
        %s382 = ssub.s32 %s22, 2
        // Predicated region
        $region61: #{tpu_custom_call.1} parent=59 // pred_check
          %p383 = pneg %p173
        $region62: #{tpu_custom_call.1} parent=59 // pred_check_branch
          %385 = sbr.rel (%p383) target = $region64
        $region63: #{tpu_custom_call.1} parent=59 // pred_region
          %s386 = sand.u32 %s158, 1
          %s387 = scalar_lea.sflag [#allocation4], %s386
          %s388 = sand.u32 %s158, 1
          %s389 = smul.addr %s388, 2
          %s390 = scalar_lea.vmem [#allocation10], %s389
          %392 = dma.done %s387, 32
        $region64: #{tpu_custom_call.1} parent=59 // pred_fallthru
          _
      $region60: #{tpu_custom_call.1} parent=5 // pred_fallthru
        _
    $region6: #{tpu_custom_call.1} parent=1 // loop_footer
      %s26 = sadd.s32 1, %s22
    $region7: #{tpu_custom_call.1} parent=1 // loop_footer_branch
      %21 = sbr.rel target = $region3
    $region8: #{tpu_custom_call.1} parent=1 // loop_exit
      _
    %393 = vsyncpa [#allocation3], 1
    %s394 = scalar_lea.sflag [#allocation3], 1
    %395 = vsyncpa %s394, 1
    %396 = vsyncpa [#allocation6], 1
    %s397 = scalar_lea.sflag [#allocation6], 1
    %398 = vsyncpa %s397, 1
    %399 = vsyncpa [#allocation9], 1
    %s400 = scalar_lea.sflag [#allocation9], 1
    %401 = vsyncpa %s400, 1
    %402 = vsyncpa [#allocation4], 1
    %s403 = scalar_lea.sflag [#allocation4], 1
    %404 = vsyncpa %s403, 1

</llo_original>
